<compile_context>
chip_gen: v5e
topology: v5e:2x2
jax: 0.10.0
libtpu: 0.0.40
codegen_flags: <defaults>
</compile_context>

<pallas_src>
import jax
import jax.numpy as jnp
from jax import lax
from jax.experimental import pallas as pl
from jax.experimental.pallas import tpu as pltpu


def _round_up(x, m):
    return (x + m - 1) // m * m


def _make_kernel(*, tm, n_valid, n_anchor, inv_t, loss_scale, matmul_dtype):
    def kernel(anchor_ref, contrast_ref, gid_row_ref, gid_col_ref, out_ref):
        i = pl.program_id(0)

        # Fold 1/temperature into the (TM, D) anchor tile instead of dividing
        # the (TM, N) logits; feed the MXU without transposing `contrast`.
        a = anchor_ref[...].astype(jnp.float32) * inv_t
        a = a.astype(matmul_dtype)
        c = contrast_ref[...].astype(matmul_dtype)
        logits = lax.dot_general(
            a, c,
            dimension_numbers=(((1,), (1,)), ((), ())),
            preferred_element_type=jnp.float32)                 # (TM, N_pad)
        n_pad = logits.shape[1]

        # Regenerate masks from iota + group ids (no [N,N] mask DMA).
        row_ids = i * tm + lax.broadcasted_iota(jnp.int32, (tm, 1), 0)
        col_ids = lax.broadcasted_iota(jnp.int32, (tm, n_pad), 1)
        col_valid = col_ids < n_valid                # drop padded contrast cols
        not_diag = col_ids != row_ids                # logits_mask (zero diagonal)
        denom_mask = col_valid & not_diag
        pos_mask = (gid_row_ref[...] == gid_col_ref[...]) & denom_mask

        # Numerically-stable log-sum-exp over the non-diagonal contrast set.
        row_max = jnp.max(jnp.where(col_valid, logits, -jnp.inf),
                          axis=1, keepdims=True)
        shifted = logits - row_max
        denom = jnp.sum(jnp.where(denom_mask, jnp.exp(shifted), 0.0),
                        axis=1, keepdims=True)
        log_z = jnp.log(denom + 1e-30)               # matches the torch reference

        # Fused masked mean of log-probs:
        #   mean_j log_prob = (sum_j m*shifted)/count - logZ
        pos_count = jnp.sum(pos_mask.astype(jnp.float32), axis=1, keepdims=True)
        pos_sum = jnp.sum(jnp.where(pos_mask, shifted, 0.0),
                          axis=1, keepdims=True)

        row_valid = row_ids < n_anchor
        safe_count = jnp.where(row_valid, pos_count, 1.0)   # guard padded rows
        mean_log_prob_pos = pos_sum / safe_count - log_z

        loss_row = loss_scale * mean_log_prob_pos
        out_ref[...] = jnp.where(row_valid, loss_row, 0.0)

    return kernel


def supcon_loss1(features, labels=None, mask=None, *,
                 temperature=0.07, contrast_mode='all', base_temperature=0.07,
                 matmul_dtype=jnp.float32):
    """JAX/Pallas forward pass of SupConLoss1."""
    if features.ndim < 3:
        raise ValueError('`features` needs to be [bsz, n_views, ...]')
    if features.ndim > 3:
        features = features.reshape(features.shape[0], features.shape[1], -1)
    bsz, n_views, d = features.shape

    if labels is not None and mask is not None:
        raise ValueError('Cannot define both `labels` and `mask`')
    if mask is not None:
        # TODO(synk): arbitrary/asymmetric [bsz,bsz] masks would need a gathered
        # mask table inside the tiled kernel; only SimCLR / labels paths done.
        raise NotImplementedError('explicit `mask` not supported; pass `labels`')

    if contrast_mode == 'all':
        anchor_count = n_views
    elif contrast_mode == 'one':
        anchor_count = 1
    else:
        raise ValueError('Unknown mode: {}'.format(contrast_mode))

    n_contrast = bsz * n_views        # rows of contrast_feature
    n_anchor = bsz * anchor_count     # anchors are the first n_anchor rows

    # ---- tiling / padding (lane-dense multiples of 128) ----
    d_pad = max(_round_up(d, 128), 128)
    n_est = max(_round_up(n_contrast, 128), 128)
    tm = 128
    vmem_budget = 12 * 1024 * 1024    # fits default scoped VMEM on v5e/v6e/v7x
    for cand in (256, 512):
        live = 4 * (4 * cand * n_est + 2 * n_est * d_pad + 2 * cand * d_pad)
        if cand <= n_est and live <= vmem_budget:
            tm = cand
    n_pad = _round_up(n_contrast, tm)
    na_pad = _round_up(n_anchor, tm)
    grid = (na_pad // tm,)

    # contrast_feature = torch.cat(torch.unbind(features, 1), 0)  (view-major)
    cf = jnp.concatenate([features[:, v, :] for v in range(n_views)], axis=0)
    cf_pad = jnp.pad(cf.astype(jnp.float32),
                     ((0, n_pad - n_contrast), (0, d_pad - d)))

    # Per-row int32 group id: two rows are positives iff their ids match
    # (diagonal removed in-kernel).
    rows = jnp.arange(n_pad, dtype=jnp.int32)
    sample_idx = rows % bsz
    if labels is None:
        gid_valid = sample_idx                          # SimCLR: same sample
    else:
        labels = jnp.asarray(labels).reshape(-1).astype(jnp.int32)
        if labels.shape[0] != bsz:
            raise ValueError('Num of labels does not match num of features')
        gid_valid = labels[sample_idx]                  # supervised: same label
    # Padded rows get unique negative ids so they never match (labels >= 0).
    gid = jnp.where(rows < n_contrast, gid_valid, -(rows + 1))
    gid_row = gid.reshape(n_pad, 1)
    gid_col = gid.reshape(1, n_pad)

    kernel = _make_kernel(
        tm=tm, n_valid=n_contrast, n_anchor=n_anchor,
        inv_t=float(1.0 / temperature),
        loss_scale=float(-(temperature / base_temperature)),
        matmul_dtype=matmul_dtype)

    per_row = pl.pallas_call(
        kernel,
        out_shape=jax.ShapeDtypeStruct((na_pad, 1), jnp.float32),
        grid_spec=pltpu.PrefetchScalarGridSpec(
            num_scalar_prefetch=0,
            grid=grid,
            in_specs=[
                pl.BlockSpec((tm, d_pad), lambda i: (i, 0)),     # anchor tile
                pl.BlockSpec((n_pad, d_pad), lambda i: (0, 0)),  # contrast (resident)
                pl.BlockSpec((tm, 1), lambda i: (i, 0)),         # anchor group ids
                pl.BlockSpec((1, n_pad), lambda i: (0, 0)),      # contrast group ids
            ],
            out_specs=pl.BlockSpec((tm, 1), lambda i: (i, 0)),
        ),
        compiler_params=pltpu.CompilerParams(
            dimension_semantics=("parallel",)),
    )(cf_pad, cf_pad, gid_row, gid_col)

    # loss.view(anchor_count, batch_size).mean() == mean over all anchor rows.
    # Padded rows were zeroed in-kernel, so a full sum / n_anchor is exact.
    return jnp.sum(per_row) / n_anchor


def _reference_supcon_loss1(features, labels=None, temperature=0.07,
                            contrast_mode='all', base_temperature=0.07):
    """Pure-JAX reference mirroring the PyTorch SupConLoss1.forward."""
    bsz, n_views, _ = features.shape
    cf = jnp.concatenate([features[:, v, :] for v in range(n_views)], axis=0)
    if contrast_mode == 'all':
        anchor, anchor_count = cf, n_views
    else:
        anchor, anchor_count = cf[:bsz], 1
    if labels is None:
        base = jnp.eye(bsz, dtype=jnp.float32)
    else:
        lbl = jnp.asarray(labels).reshape(-1, 1)
        base = (lbl == lbl.T).astype(jnp.float32)
    n_anchor = bsz * anchor_count
    logits = (anchor @ cf.T) / temperature
    logits = logits - jnp.max(logits, axis=1, keepdims=True)
    lmask = jnp.ones((n_anchor, bsz * n_views), jnp.float32)
    lmask = lmask.at[jnp.arange(n_anchor), jnp.arange(n_anchor)].set(0.0)
    m = jnp.tile(base, (anchor_count, n_views)) * lmask
    exp_logits = jnp.exp(logits) * lmask
    log_prob = logits - jnp.log(exp_logits.sum(1, keepdims=True) + 1e-30)
    mlpp = (m * log_prob).sum(1) / m.sum(1)
    return jnp.mean(-(temperature / base_temperature) * mlpp)


if __name__ == "__main__":
    key = jax.random.PRNGKey(0)
    bsz, n_views, feat_dim = 4, 2, 32
    features = jax.random.normal(key, (bsz, n_views, feat_dim), dtype=jnp.float32)
    # L2-normalize (standard usage for SupCon / SimCLR)
    features = features / jnp.linalg.norm(features, axis=-1, keepdims=True)

    # SimCLR (unsupervised) path
    loss = jax.block_until_ready(supcon_loss1(features))
    ref = jax.block_until_ready(_reference_supcon_loss1(features))
    assert jnp.allclose(loss, ref, rtol=1e-4, atol=1e-4), (loss, ref)

    # Supervised (labels) path
    labels = jnp.array([0, 1, 0, 1], dtype=jnp.int32)
    loss_l = jax.block_until_ready(supcon_loss1(features, labels=labels))
    ref_l = jax.block_until_ready(_reference_supcon_loss1(features, labels=labels))
    assert jnp.allclose(loss_l, ref_l, rtol=1e-4, atol=1e-4), (loss_l, ref_l)

    print("KERNEL_OK")
</pallas_src>

<mosaic_0001>
module attributes {stable_mosaic.version = 11 : i64} {
  func.func @kernel(%arg0: i32, %arg1: memref<128x128xf32, #tpu.memory_space<vmem>>, %arg2: memref<128x128xf32, #tpu.memory_space<vmem>>, %arg3: memref<128x1xi32, #tpu.memory_space<vmem>>, %arg4: memref<1x128xi32, #tpu.memory_space<vmem>>, %arg5: memref<128x1xf32, #tpu.memory_space<vmem>>) attributes {dimension_semantics = [#tpu.dimension_semantics<parallel>], iteration_bounds = array<i64: 1>, scalar_prefetch = 0 : i64, scratch_operands = 0 : i64, tpu.core_type = #tpu.core_type<tc>, window_params = [{transform_indices = @transform_0, window_bounds = array<i64: 128, 128>}, {pipeline_mode = #tpu.pipeline_mode<synchronous>, transform_indices = @transform_1, window_bounds = array<i64: 128, 128>}, {transform_indices = @transform_2, window_bounds = array<i64: 128, 1>}, {pipeline_mode = #tpu.pipeline_mode<synchronous>, transform_indices = @transform_3, window_bounds = array<i64: 1, 128>}, {transform_indices = @transform_4, window_bounds = array<i64: 128, 1>}]} {
    %c0 = arith.constant 0 : index
    %c0_0 = arith.constant 0 : index
    %0 = vector.load %arg1[%c0, %c0_0] : memref<128x128xf32, #tpu.memory_space<vmem>>, vector<128x128xf32>
    %cst = arith.constant 14.2857141 : f32
    %1 = vector.broadcast %cst : f32 to vector<128x128xf32>
    %2 = arith.mulf %0, %1 : vector<128x128xf32>
    %c0_1 = arith.constant 0 : index
    %c0_2 = arith.constant 0 : index
    %3 = vector.load %arg2[%c0_1, %c0_2] : memref<128x128xf32, #tpu.memory_space<vmem>>, vector<128x128xf32>
    %cst_3 = arith.constant dense<0.000000e+00> : vector<128x128xf32>
    %4 = tpu.matmul %2, %3, %cst_3 {dimension_numbers = #tpu.dot_dimension_numbers<[1], [1], [0], [0], [0, 0, 1, 0], [], []>} : vector<128x128xf32>, vector<128x128xf32>, vector<128x128xf32> -> vector<128x128xf32>
    %c128_i32 = arith.constant 128 : i32
    %5 = arith.muli %arg0, %c128_i32 : i32
    %6 = tpu.iota {dimensions = array<i32: 0>} : vector<128x1xi32>
    %7 = vector.broadcast %5 : i32 to vector<128x1xi32>
    %8 = arith.addi %7, %6 : vector<128x1xi32>
    %9 = tpu.iota {dimensions = array<i32: 1>} : vector<128x128xi32>
    %c8_i32 = arith.constant 8 : i32
    %10 = vector.broadcast %c8_i32 : i32 to vector<128x128xi32>
    %11 = arith.cmpi slt, %9, %10 : vector<128x128xi32>
    %12 = vector.broadcast %8 : vector<128x1xi32> to vector<128x128xi32>
    %13 = arith.cmpi ne, %9, %12 : vector<128x128xi32>
    %14 = arith.andi %11, %13 : vector<128x128xi1>
    %c0_4 = arith.constant 0 : index
    %c0_5 = arith.constant 0 : index
    %15 = vector.load %arg3[%c0_4, %c0_5] : memref<128x1xi32, #tpu.memory_space<vmem>>, vector<128x1xi32>
    %c0_6 = arith.constant 0 : index
    %c0_7 = arith.constant 0 : index
    %16 = vector.load %arg4[%c0_6, %c0_7] : memref<1x128xi32, #tpu.memory_space<vmem>>, vector<1x128xi32>
    %17 = vector.broadcast %15 : vector<128x1xi32> to vector<128x128xi32>
    %18 = vector.broadcast %16 : vector<1x128xi32> to vector<128x128xi32>
    %19 = arith.cmpi eq, %17, %18 : vector<128x128xi32>
    %20 = arith.andi %19, %14 : vector<128x128xi1>
    %cst_8 = arith.constant 0xFF800000 : f32
    %21 = vector.broadcast %cst_8 : f32 to vector<128x128xf32>
    %22 = arith.select %11, %4, %21 : vector<128x128xi1>, vector<128x128xf32>
    %cst_9 = arith.constant dense<0xFF800000> : vector<128xf32>
    %23 = vector.multi_reduction <maximumf>, %22, %cst_9 [1] : vector<128x128xf32> to vector<128xf32>
    %24 = vector.shape_cast %23 : vector<128xf32> to vector<128x1xf32>
    %25 = vector.broadcast %24 : vector<128x1xf32> to vector<128x128xf32>
    %26 = arith.subf %4, %25 : vector<128x128xf32>
    %27 = math.exp %26 : vector<128x128xf32>
    %cst_10 = arith.constant 0.000000e+00 : f32
    %28 = vector.broadcast %cst_10 : f32 to vector<128x128xf32>
    %29 = arith.select %14, %27, %28 : vector<128x128xi1>, vector<128x128xf32>
    %cst_11 = arith.constant dense<0.000000e+00> : vector<128xf32>
    %30 = vector.multi_reduction <add>, %29, %cst_11 [1] : vector<128x128xf32> to vector<128xf32>
    %31 = vector.shape_cast %30 : vector<128xf32> to vector<128x1xf32>
    %cst_12 = arith.constant 1.000000e-30 : f32
    %32 = vector.broadcast %cst_12 : f32 to vector<128x1xf32>
    %33 = arith.addf %31, %32 : vector<128x1xf32>
    %34 = math.log %33 : vector<128x1xf32>
    %35 = arith.extui %20 : vector<128x128xi1> to vector<128x128xi32>
    %36 = arith.sitofp %35 : vector<128x128xi32> to vector<128x128xf32>
    %cst_13 = arith.constant dense<0.000000e+00> : vector<128xf32>
    %37 = vector.multi_reduction <add>, %36, %cst_13 [1] : vector<128x128xf32> to vector<128xf32>
    %38 = vector.shape_cast %37 : vector<128xf32> to vector<128x1xf32>
    %cst_14 = arith.constant 0.000000e+00 : f32
    %39 = vector.broadcast %cst_14 : f32 to vector<128x128xf32>
    %40 = arith.select %20, %26, %39 : vector<128x128xi1>, vector<128x128xf32>
    %cst_15 = arith.constant dense<0.000000e+00> : vector<128xf32>
    %41 = vector.multi_reduction <add>, %40, %cst_15 [1] : vector<128x128xf32> to vector<128xf32>
    %42 = vector.shape_cast %41 : vector<128xf32> to vector<128x1xf32>
    %c8_i32_16 = arith.constant 8 : i32
    %43 = vector.broadcast %c8_i32_16 : i32 to vector<128x1xi32>
    %44 = arith.cmpi slt, %8, %43 : vector<128x1xi32>
    %cst_17 = arith.constant 1.000000e+00 : f32
    %45 = vector.broadcast %cst_17 : f32 to vector<128x1xf32>
    %46 = arith.select %44, %38, %45 : vector<128x1xi1>, vector<128x1xf32>
    %47 = arith.divf %42, %46 : vector<128x1xf32>
    %48 = arith.subf %47, %34 : vector<128x1xf32>
    %cst_18 = arith.constant -1.000000e+00 : f32
    %49 = vector.broadcast %cst_18 : f32 to vector<128x1xf32>
    %50 = arith.mulf %49, %48 : vector<128x1xf32>
    %cst_19 = arith.constant 0.000000e+00 : f32
    %51 = vector.broadcast %cst_19 : f32 to vector<128x1xf32>
    %52 = arith.select %44, %50, %51 : vector<128x1xi1>, vector<128x1xf32>
    %c0_20 = arith.constant 0 : index
    %c0_21 = arith.constant 0 : index
    %53 = vector.load %arg5[%c0_20, %c0_21] : memref<128x1xf32, #tpu.memory_space<vmem>>, vector<128x1xf32>
    tpu.vector_store %arg5[%c0_20, %c0_21], %52 {strides = array<i32>} : memref<128x1xf32, #tpu.memory_space<vmem>>, vector<128x1xf32>,
    return
  }
  func.func @transform_0(%arg0: i32) -> (i32, i32) {
    %c0_i32 = arith.constant 0 : i32
    %c0_i32_0 = arith.constant 0 : i32
    return %arg0, %c0_i32 : i32, i32
  }
  func.func @transform_1(%arg0: i32) -> (i32, i32) {
    %c0_i32 = arith.constant 0 : i32
    %c0_i32_0 = arith.constant 0 : i32
    %c0_i32_1 = arith.constant 0 : i32
    return %c0_i32, %c0_i32_0 : i32, i32
  }
  func.func @transform_2(%arg0: i32) -> (i32, i32) {
    %c0_i32 = arith.constant 0 : i32
    %c0_i32_0 = arith.constant 0 : i32
    return %arg0, %c0_i32 : i32, i32
  }
  func.func @transform_3(%arg0: i32) -> (i32, i32) {
    %c0_i32 = arith.constant 0 : i32
    %c0_i32_0 = arith.constant 0 : i32
    %c0_i32_1 = arith.constant 0 : i32
    return %c0_i32, %c0_i32_0 : i32, i32
  }
  func.func @transform_4(%arg0: i32) -> (i32, i32) {
    %c0_i32 = arith.constant 0 : i32
    %c0_i32_0 = arith.constant 0 : i32
    return %arg0, %c0_i32 : i32, i32
  }
}

</mosaic_0001>

<llo_original>
// kernel: tpu_custom_call.1
$region0: #{tpu_custom_call.1}
  #allocation0 [shape = 'u32[]', space=smem, size = 0x4, offset = 0x4, fixed_abs, tag = 'smem constant byte address 0x4 - core index']
  #allocation1 [shape = 'u32[72,128]{1,0:T(1,128)}', space=vmem, size = 0x9000, scoped, tag = 'internal scratch']
  %s0 = inlined_call_operand.vmem [shape: f32[128,128], index: 0, kind: input, shape index: {}]
  %s1 = inlined_call_operand.hbm [shape: f32[128,128], index: 1, kind: input, shape index: {}]
  %s2 = inlined_call_operand.vmem [shape: s32[128,1], index: 2, kind: input, shape index: {}]
  %s3 = inlined_call_operand.vmem [shape: s32[1,128], index: 3, kind: input, shape index: {}]
  %s4 = inlined_call_operand.vmem [shape: f32[128,1], index: 4, kind: output, shape index: {}]
  %s5 = sld [smem:[#allocation0]]
  $region30: #{tpu_custom_call.1} parent=0
    _
  %s7 = ssub.s32 1, %s5
  %s8 = scalar_select 0, %s7, %s5
  $region1: #{tpu_custom_call.1} parent=0
    #allocation2 [shape = 'u8[65536]{0}', space=vmem, size = 0x10000, scoped, tag = 'input window, operand 1, single buffered']
    #allocation3 [shape = 's32[1]{0}', space=sflag, size = 0x4, scoped, tag = 'scoped memory for tpu_custom_call.1']
    %9 = vsyncpa [#allocation3], 0
    // Predicated region
    $region2: #{tpu_custom_call.1} parent=1 // pred_check
      _
    $region3: #{tpu_custom_call.1} parent=1 // pred_check_branch
      %11 = sbr.rel (0) target = $region5
    $region4: #{tpu_custom_call.1} parent=1 // pred_region
      _
    $region5: #{tpu_custom_call.1} parent=1 // pred_fallthru
      _
    // Predicated region
    $region6: #{tpu_custom_call.1} parent=1 // pred_check
      _
    $region7: #{tpu_custom_call.1} parent=1 // pred_check_branch
      %13 = sbr.rel (0) target = $region9
    $region8: #{tpu_custom_call.1} parent=1 // pred_region
      %15 = vsyncadd [#allocation3], 0
      %s16 = sshll.u32 %s1, 4
      %s17 = int_to_ptr.hbm [resolvable:$true] %s16
      %s18 = sshll.u32 [#allocation2], 4
      %s19 = int_to_ptr.vmem [resolvable:$true] %s18
      %24 = dma.hbm_to_vmem [thread:$0]  %s17, 2048, %s19, [#allocation3], 128, 128, 8
    $region9: #{tpu_custom_call.1} parent=1 // pred_fallthru
      _
    // Predicated region
    $region10: #{tpu_custom_call.1} parent=1 // pred_check
      _
    $region11: #{tpu_custom_call.1} parent=1 // pred_check_branch
      %26 = sbr.rel (0) target = $region13
    $region12: #{tpu_custom_call.1} parent=1 // pred_region
      _
    $region13: #{tpu_custom_call.1} parent=1 // pred_fallthru
      _
    // Predicated region
    $region14: #{tpu_custom_call.1} parent=1 // pred_check
      _
    $region15: #{tpu_custom_call.1} parent=1 // pred_check_branch
      %28 = sbr.rel (0) target = $region17
    $region16: #{tpu_custom_call.1} parent=1 // pred_region
      _
    $region17: #{tpu_custom_call.1} parent=1 // pred_fallthru
      _
    // Predicated region
    $region18: #{tpu_custom_call.1} parent=1 // pred_check
      _
    $region19: #{tpu_custom_call.1} parent=1 // pred_check_branch
      %30 = sbr.rel (0) target = $region21
    $region20: #{tpu_custom_call.1} parent=1 // pred_region
      %32 = dma.done [#allocation3], 2048
    $region21: #{tpu_custom_call.1} parent=1 // pred_fallthru
      _
    %v33 = vld [vmem:[%s0] sm:$0xff]
    %v34 = vld [vmem:[%s0 + $0x8] sm:$0xff]
    %v35 = vld [vmem:[%s0 + $0x10] sm:$0xff]
    %v36 = vld [vmem:[%s0 + $0x18] sm:$0xff]
    %v37 = vld [vmem:[%s0 + $0x20] sm:$0xff]
    %v38 = vld [vmem:[%s0 + $0x28] sm:$0xff]
    %v39 = vld [vmem:[%s0 + $0x30] sm:$0xff]
    %v40 = vld [vmem:[%s0 + $0x38] sm:$0xff]
    %v41 = vld [vmem:[%s0 + $0x40] sm:$0xff]
    %v42 = vld [vmem:[%s0 + $0x48] sm:$0xff]
    %v43 = vld [vmem:[%s0 + $0x50] sm:$0xff]
    %v44 = vld [vmem:[%s0 + $0x58] sm:$0xff]
    %v45 = vld [vmem:[%s0 + $0x60] sm:$0xff]
    %v46 = vld [vmem:[%s0 + $0x68] sm:$0xff]
    %v47 = vld [vmem:[%s0 + $0x70] sm:$0xff]
    %v48 = vld [vmem:[%s0 + $0x78] sm:$0xff]
    %v49 = vmul.f32 %v33, 14.285714
    %v50 = vmul.f32 %v34, 14.285714
    %v51 = vmul.f32 %v35, 14.285714
    %v52 = vmul.f32 %v36, 14.285714
    %v53 = vmul.f32 %v37, 14.285714
    %v54 = vmul.f32 %v38, 14.285714
    %v55 = vmul.f32 %v39, 14.285714
    %v56 = vmul.f32 %v40, 14.285714
    %v57 = vmul.f32 %v41, 14.285714
    %v58 = vmul.f32 %v42, 14.285714
    %v59 = vmul.f32 %v43, 14.285714
    %v60 = vmul.f32 %v44, 14.285714
    %v61 = vmul.f32 %v45, 14.285714
    %v62 = vmul.f32 %v46, 14.285714
    %v63 = vmul.f32 %v47, 14.285714
    %v64 = vmul.f32 %v48, 14.285714
    %v65 = vld [vmem:[#allocation2] sm:$0xff]
    %v66 = vld [vmem:[#allocation2 + $0x8] sm:$0xff]
    %v67 = vld [vmem:[#allocation2 + $0x10] sm:$0xff]
    %v68 = vld [vmem:[#allocation2 + $0x18] sm:$0xff]
    %v69 = vld [vmem:[#allocation2 + $0x20] sm:$0xff]
    %v70 = vld [vmem:[#allocation2 + $0x28] sm:$0xff]
    %v71 = vld [vmem:[#allocation2 + $0x30] sm:$0xff]
    %v72 = vld [vmem:[#allocation2 + $0x38] sm:$0xff]
    %v73 = vld [vmem:[#allocation2 + $0x40] sm:$0xff]
    %v74 = vld [vmem:[#allocation2 + $0x48] sm:$0xff]
    %v75 = vld [vmem:[#allocation2 + $0x50] sm:$0xff]
    %v76 = vld [vmem:[#allocation2 + $0x58] sm:$0xff]
    %v77 = vld [vmem:[#allocation2 + $0x60] sm:$0xff]
    %v78 = vld [vmem:[#allocation2 + $0x68] sm:$0xff]
    %v79 = vld [vmem:[#allocation2 + $0x70] sm:$0xff]
    %v80 = vld [vmem:[#allocation2 + $0x78] sm:$0xff]
    %81 = vmatpush.xpose.msra.mxu0 %v80
    %82 = vmatpush.xpose.msra.mxu0 %v79
    %83 = vmatpush.xpose.msra.mxu0 %v78
    %84 = vmatpush.xpose.msra.mxu0 %v77
    %85 = vmatpush.xpose.msra.mxu0 %v76
    %86 = vmatpush.xpose.msra.mxu0 %v75
    %87 = vmatpush.xpose.msra.mxu0 %v74
    %88 = vmatpush.xpose.msra.mxu0 %v73
    %89 = vmatpush.xpose.msra.mxu0 %v72
    %90 = vmatpush.xpose.msra.mxu0 %v71
    %91 = vmatpush.xpose.msra.mxu0 %v70
    %92 = vmatpush.xpose.msra.mxu0 %v69
    %93 = vmatpush.xpose.msra.mxu0 %v68
    %94 = vmatpush.xpose.msra.mxu0 %v67
    %95 = vmatpush.xpose.msra.mxu0 %v66
    %96 = vmatpush.xpose.msra.mxu0 %v65
    %97 = vmatmul.f32.gmra.mxu0 %v49
    %v98 = vpop.f32.mrf.mxu0
    %v99 = vadd.f32 0.0, %v98
    %100 = vmatmul.f32.gmra.mxu0 %v50
    %v101 = vpop.f32.mrf.mxu0
    %v102 = vadd.f32 0.0, %v101
    %103 = vmatmul.f32.gmra.mxu0 %v51
    %v104 = vpop.f32.mrf.mxu0
    %v105 = vadd.f32 0.0, %v104
    %106 = vmatmul.f32.gmra.mxu0 %v52
    %v107 = vpop.f32.mrf.mxu0
    %v108 = vadd.f32 0.0, %v107
    %109 = vmatmul.f32.gmra.mxu0 %v53
    %v110 = vpop.f32.mrf.mxu0
    %v111 = vadd.f32 0.0, %v110
    %112 = vmatmul.f32.gmra.mxu0 %v54
    %v113 = vpop.f32.mrf.mxu0
    %v114 = vadd.f32 0.0, %v113
    %115 = vmatmul.f32.gmra.mxu0 %v55
    %v116 = vpop.f32.mrf.mxu0
    %v117 = vadd.f32 0.0, %v116
    %118 = vmatmul.f32.gmra.mxu0 %v56
    %v119 = vpop.f32.mrf.mxu0
    %v120 = vadd.f32 0.0, %v119
    %121 = vmatmul.f32.gmra.mxu0 %v57
    %v122 = vpop.f32.mrf.mxu0
    %v123 = vadd.f32 0.0, %v122
    %124 = vmatmul.f32.gmra.mxu0 %v58
    %v125 = vpop.f32.mrf.mxu0
    %v126 = vadd.f32 0.0, %v125
    %127 = vmatmul.f32.gmra.mxu0 %v59
    %v128 = vpop.f32.mrf.mxu0
    %v129 = vadd.f32 0.0, %v128
    %130 = vmatmul.f32.gmra.mxu0 %v60
    %v131 = vpop.f32.mrf.mxu0
    %v132 = vadd.f32 0.0, %v131
    %133 = vmatmul.f32.gmra.mxu0 %v61
    %v134 = vpop.f32.mrf.mxu0
    %v135 = vadd.f32 0.0, %v134
    %136 = vmatmul.f32.gmra.mxu0 %v62
    %v137 = vpop.f32.mrf.mxu0
    %v138 = vadd.f32 0.0, %v137
    %139 = vmatmul.f32.gmra.mxu0 %v63
    %v140 = vpop.f32.mrf.mxu0
    %v141 = vadd.f32 0.0, %v140
    %142 = vmatmul.f32.gmra.mxu0 %v64
    %v143 = vpop.f32.mrf.mxu0
    %v144 = vadd.f32 0.0, %v143
    %145 = vdwg.mxu0
    %s146 = smul.u32 0, 128
    %v147 = vlaneseq
    %v148 = vshrl.u32 %v147, 7
    %v149 = vadd.s32 %v148, 8
    %v150 = vadd.s32 %v148, 16
    %v151 = vadd.s32 %v148, 24
    %v152 = vadd.s32 %v148, 32
    %v153 = vadd.s32 %v148, 40
    %v154 = vadd.s32 %v148, 48
    %v155 = vadd.s32 %v148, 56
    %v156 = vadd.s32 %v148, 64
    %v157 = vadd.s32 %v148, 72
    %v158 = vadd.s32 %v148, 80
    %v159 = vadd.s32 %v148, 88
    %v160 = vadd.s32 %v148, 96
    %v161 = vadd.s32 %v148, 104
    %v162 = vadd.s32 %v148, 112
    %v163 = vadd.s32 %v148, 120
    %v164 = vstv %s146
    %v165 = vadd.s32 %v164, %v148
    %v166 = vadd.s32 %v164, %v149
    %v167 = vadd.s32 %v164, %v150
    %v168 = vadd.s32 %v164, %v151
    %v169 = vadd.s32 %v164, %v152
    %v170 = vadd.s32 %v164, %v153
    %v171 = vadd.s32 %v164, %v154
    %v172 = vadd.s32 %v164, %v155
    %v173 = vadd.s32 %v164, %v156
    %v174 = vadd.s32 %v164, %v157
    %v175 = vadd.s32 %v164, %v158
    %v176 = vadd.s32 %v164, %v159
    %v177 = vadd.s32 %v164, %v160
    %v178 = vadd.s32 %v164, %v161
    %v179 = vadd.s32 %v164, %v162
    %v180 = vadd.s32 %v164, %v163
    %v181 = vlaneseq
    %v182 = vand.u32 %v181, 127
    %vm183 = vcmp.lt.s32.totalorder %v182, 8
    %vm184 = vcmp.ne.s32.totalorder %v182, %v165
    %vm185 = vcmp.ne.s32.totalorder %v182, %v166
    %vm186 = vcmp.ne.s32.totalorder %v182, %v167
    %vm187 = vcmp.ne.s32.totalorder %v182, %v168
    %vm188 = vcmp.ne.s32.totalorder %v182, %v169
    %vm189 = vcmp.ne.s32.totalorder %v182, %v170
    %vm190 = vcmp.ne.s32.totalorder %v182, %v171
    %vm191 = vcmp.ne.s32.totalorder %v182, %v172
    %vm192 = vcmp.ne.s32.totalorder %v182, %v173
    %vm193 = vcmp.ne.s32.totalorder %v182, %v174
    %vm194 = vcmp.ne.s32.totalorder %v182, %v175
    %vm195 = vcmp.ne.s32.totalorder %v182, %v176
    %vm196 = vcmp.ne.s32.totalorder %v182, %v177
    %vm197 = vcmp.ne.s32.totalorder %v182, %v178
    %vm198 = vcmp.ne.s32.totalorder %v182, %v179
    %vm199 = vcmp.ne.s32.totalorder %v182, %v180
    %vm200 = vmand %vm183, %vm184
    %vm201 = vmand %vm183, %vm185
    %vm202 = vmand %vm183, %vm186
    %vm203 = vmand %vm183, %vm187
    %vm204 = vmand %vm183, %vm188
    %vm205 = vmand %vm183, %vm189
    %vm206 = vmand %vm183, %vm190
    %vm207 = vmand %vm183, %vm191
    %vm208 = vmand %vm183, %vm192
    %vm209 = vmand %vm183, %vm193
    %vm210 = vmand %vm183, %vm194
    %vm211 = vmand %vm183, %vm195
    %vm212 = vmand %vm183, %vm196
    %vm213 = vmand %vm183, %vm197
    %vm214 = vmand %vm183, %vm198
    %vm215 = vmand %vm183, %vm199
    %v216 = vld [vmem:[%s2] sm:$0xff]
    %v217 = vld [vmem:[%s2 + $0x8] sm:$0xff]
    %v218 = vld [vmem:[%s2 + $0x10] sm:$0xff]
    %v219 = vld [vmem:[%s2 + $0x18] sm:$0xff]
    %v220 = vld [vmem:[%s2 + $0x20] sm:$0xff]
    %v221 = vld [vmem:[%s2 + $0x28] sm:$0xff]
    %v222 = vld [vmem:[%s2 + $0x30] sm:$0xff]
    %v223 = vld [vmem:[%s2 + $0x38] sm:$0xff]
    %v224 = vld [vmem:[%s2 + $0x40] sm:$0xff]
    %v225 = vld [vmem:[%s2 + $0x48] sm:$0xff]
    %v226 = vld [vmem:[%s2 + $0x50] sm:$0xff]
    %v227 = vld [vmem:[%s2 + $0x58] sm:$0xff]
    %v228 = vld [vmem:[%s2 + $0x60] sm:$0xff]
    %v229 = vld [vmem:[%s2 + $0x68] sm:$0xff]
    %v230 = vld [vmem:[%s2 + $0x70] sm:$0xff]
    %v231 = vld [vmem:[%s2 + $0x78] sm:$0xff]
    %v232 = vld [vmem:[%s3] sm:$0x1]
    %233 = vset.pattern.permute.xlu0 0
    %234 = vperm.xlu0 %233, %v216
    %v235 = vpop.permute.xlu0 %234
    %236 = vset.pattern.permute.xlu0 0
    %237 = vperm.xlu0 %236, %v217
    %v238 = vpop.permute.xlu0 %237
    %239 = vset.pattern.permute.xlu0 0
    %240 = vperm.xlu0 %239, %v218
    %v241 = vpop.permute.xlu0 %240
    %242 = vset.pattern.permute.xlu0 0
    %243 = vperm.xlu0 %242, %v219
    %v244 = vpop.permute.xlu0 %243
    %245 = vset.pattern.permute.xlu0 0
    %246 = vperm.xlu0 %245, %v220
    %v247 = vpop.permute.xlu0 %246
    %248 = vset.pattern.permute.xlu0 0
    %249 = vperm.xlu0 %248, %v221
    %v250 = vpop.permute.xlu0 %249
    %251 = vset.pattern.permute.xlu0 0
    %252 = vperm.xlu0 %251, %v222
    %v253 = vpop.permute.xlu0 %252
    %254 = vset.pattern.permute.xlu0 0
    %255 = vperm.xlu0 %254, %v223
    %v256 = vpop.permute.xlu0 %255
    %257 = vset.pattern.permute.xlu0 0
    %258 = vperm.xlu0 %257, %v224
    %v259 = vpop.permute.xlu0 %258
    %260 = vset.pattern.permute.xlu0 0
    %261 = vperm.xlu0 %260, %v225
    %v262 = vpop.permute.xlu0 %261
    %263 = vset.pattern.permute.xlu0 0
    %264 = vperm.xlu0 %263, %v226
    %v265 = vpop.permute.xlu0 %264
    %266 = vset.pattern.permute.xlu0 0
    %267 = vperm.xlu0 %266, %v227
    %v268 = vpop.permute.xlu0 %267
    %269 = vset.pattern.permute.xlu0 0
    %270 = vperm.xlu0 %269, %v228
    %v271 = vpop.permute.xlu0 %270
    %272 = vset.pattern.permute.xlu0 0
    %273 = vperm.xlu0 %272, %v229
    %v274 = vpop.permute.xlu0 %273
    %275 = vset.pattern.permute.xlu0 0
    %276 = vperm.xlu0 %275, %v230
    %v277 = vpop.permute.xlu0 %276
    %278 = vset.pattern.permute.xlu0 0
    %279 = vperm.xlu0 %278, %v231
    %v280 = vpop.permute.xlu0 %279
    %v281 = vperm.slane %v232, 0
    %vm282 = vcmp.eq.s32.totalorder %v235, %v281
    %vm283 = vcmp.eq.s32.totalorder %v238, %v281
    %vm284 = vcmp.eq.s32.totalorder %v241, %v281
    %vm285 = vcmp.eq.s32.totalorder %v244, %v281
    %vm286 = vcmp.eq.s32.totalorder %v247, %v281
    %vm287 = vcmp.eq.s32.totalorder %v250, %v281
    %vm288 = vcmp.eq.s32.totalorder %v253, %v281
    %vm289 = vcmp.eq.s32.totalorder %v256, %v281
    %vm290 = vcmp.eq.s32.totalorder %v259, %v281
    %vm291 = vcmp.eq.s32.totalorder %v262, %v281
    %vm292 = vcmp.eq.s32.totalorder %v265, %v281
    %vm293 = vcmp.eq.s32.totalorder %v268, %v281
    %vm294 = vcmp.eq.s32.totalorder %v271, %v281
    %vm295 = vcmp.eq.s32.totalorder %v274, %v281
    %vm296 = vcmp.eq.s32.totalorder %v277, %v281
    %vm297 = vcmp.eq.s32.totalorder %v280, %v281
    %vm298 = vmand %vm282, %vm200
    %vm299 = vmand %vm283, %vm201
    %vm300 = vmand %vm284, %vm202
    %vm301 = vmand %vm285, %vm203
    %vm302 = vmand %vm286, %vm204
    %vm303 = vmand %vm287, %vm205
    %vm304 = vmand %vm288, %vm206
    %vm305 = vmand %vm289, %vm207
    %vm306 = vmand %vm290, %vm208
    %vm307 = vmand %vm291, %vm209
    %vm308 = vmand %vm292, %vm210
    %vm309 = vmand %vm293, %vm211
    %vm310 = vmand %vm294, %vm212
    %vm311 = vmand %vm295, %vm213
    %vm312 = vmand %vm296, %vm214
    %vm313 = vmand %vm297, %vm215
    %v314 = vsel %vm183, %v99, -inf
    %v315 = vsel %vm183, %v102, -inf
    %v316 = vsel %vm183, %v105, -inf
    %v317 = vsel %vm183, %v108, -inf
    %v318 = vsel %vm183, %v111, -inf
    %v319 = vsel %vm183, %v114, -inf
    %v320 = vsel %vm183, %v117, -inf
    %v321 = vsel %vm183, %v120, -inf
    %v322 = vsel %vm183, %v123, -inf
    %v323 = vsel %vm183, %v126, -inf
    %v324 = vsel %vm183, %v129, -inf
    %v325 = vsel %vm183, %v132, -inf
    %v326 = vsel %vm183, %v135, -inf
    %v327 = vsel %vm183, %v138, -inf
    %v328 = vsel %vm183, %v141, -inf
    %v329 = vsel %vm183, %v144, -inf
    %330 = vmax.xlane.f32.xlu0 %v314
    %v331 = vpop.xlane.xlu0 %330
    %332 = vmax.xlane.f32.xlu0 %v315
    %v333 = vpop.xlane.xlu0 %332
    %334 = vmax.xlane.f32.xlu0 %v316
    %v335 = vpop.xlane.xlu0 %334
    %336 = vmax.xlane.f32.xlu0 %v317
    %v337 = vpop.xlane.xlu0 %336
    %338 = vmax.xlane.f32.xlu0 %v318
    %v339 = vpop.xlane.xlu0 %338
    %340 = vmax.xlane.f32.xlu0 %v319
    %v341 = vpop.xlane.xlu0 %340
    %342 = vmax.xlane.f32.xlu0 %v320
    %v343 = vpop.xlane.xlu0 %342
    %344 = vmax.xlane.f32.xlu0 %v321
    %v345 = vpop.xlane.xlu0 %344
    %346 = vmax.xlane.f32.xlu0 %v322
    %v347 = vpop.xlane.xlu0 %346
    %348 = vmax.xlane.f32.xlu0 %v323
    %v349 = vpop.xlane.xlu0 %348
    %350 = vmax.xlane.f32.xlu0 %v324
    %v351 = vpop.xlane.xlu0 %350
    %352 = vmax.xlane.f32.xlu0 %v325
    %v353 = vpop.xlane.xlu0 %352
    %354 = vmax.xlane.f32.xlu0 %v326
    %v355 = vpop.xlane.xlu0 %354
    %356 = vmax.xlane.f32.xlu0 %v327
    %v357 = vpop.xlane.xlu0 %356
    %358 = vmax.xlane.f32.xlu0 %v328
    %v359 = vpop.xlane.xlu0 %358
    %360 = vmax.xlane.f32.xlu0 %v329
    %v361 = vpop.xlane.xlu0 %360
    %v362 = vsub.f32 %v99, %v331
    %v363 = vsub.f32 %v102, %v333
    %v364 = vsub.f32 %v105, %v335
    %v365 = vsub.f32 %v108, %v337
    %v366 = vsub.f32 %v111, %v339
    %v367 = vsub.f32 %v114, %v341
    %v368 = vsub.f32 %v117, %v343
    %v369 = vsub.f32 %v120, %v345
    %v370 = vsub.f32 %v123, %v347
    %v371 = vsub.f32 %v126, %v349
    %v372 = vsub.f32 %v129, %v351
    %v373 = vsub.f32 %v132, %v353
    %v374 = vsub.f32 %v135, %v355
    %v375 = vsub.f32 %v138, %v357
    %v376 = vsub.f32 %v141, %v359
    %v377 = vsub.f32 %v144, %v361
    %v378 = vmul.f32 %v362, 1.442695
    %v379 = vpow.pop %v378
    %v380 = vmul.f32 %v363, 1.442695
    %v381 = vpow.pop %v380
    %v382 = vmul.f32 %v364, 1.442695
    %v383 = vpow.pop %v382
    %v384 = vmul.f32 %v365, 1.442695
    %v385 = vpow.pop %v384
    %v386 = vmul.f32 %v366, 1.442695
    %v387 = vpow.pop %v386
    %v388 = vmul.f32 %v367, 1.442695
    %v389 = vpow.pop %v388
    %v390 = vmul.f32 %v368, 1.442695
    %v391 = vpow.pop %v390
    %v392 = vmul.f32 %v369, 1.442695
    %v393 = vpow.pop %v392
    %v394 = vmul.f32 %v370, 1.442695
    %v395 = vpow.pop %v394
    %v396 = vmul.f32 %v371, 1.442695
    %v397 = vpow.pop %v396
    %v398 = vmul.f32 %v372, 1.442695
    %v399 = vpow.pop %v398
    %v400 = vmul.f32 %v373, 1.442695
    %v401 = vpow.pop %v400
    %v402 = vmul.f32 %v374, 1.442695
    %v403 = vpow.pop %v402
    %v404 = vmul.f32 %v375, 1.442695
    %v405 = vpow.pop %v404
    %v406 = vmul.f32 %v376, 1.442695
    %v407 = vpow.pop %v406
    %v408 = vmul.f32 %v377, 1.442695
    %v409 = vpow.pop %v408
    %v410 = vsel %vm200, %v379, 0.0
    %v411 = vsel %vm201, %v381, 0.0
    %v412 = vsel %vm202, %v383, 0.0
    %v413 = vsel %vm203, %v385, 0.0
    %v414 = vsel %vm204, %v387, 0.0
    %v415 = vsel %vm205, %v389, 0.0
    %v416 = vsel %vm206, %v391, 0.0
    %v417 = vsel %vm207, %v393, 0.0
    %v418 = vsel %vm208, %v395, 0.0
    %v419 = vsel %vm209, %v397, 0.0
    %v420 = vsel %vm210, %v399, 0.0
    %v421 = vsel %vm211, %v401, 0.0
    %v422 = vsel %vm212, %v403, 0.0
    %v423 = vsel %vm213, %v405, 0.0
    %v424 = vsel %vm214, %v407, 0.0
    %v425 = vsel %vm215, %v409, 0.0
    %426 = vadd.xlane.f32.xlu0 %v410
    %v427 = vpop.xlane.xlu0 %426
    %428 = vadd.xlane.f32.xlu0 %v411
    %v429 = vpop.xlane.xlu0 %428
    %430 = vadd.xlane.f32.xlu0 %v412
    %v431 = vpop.xlane.xlu0 %430
    %432 = vadd.xlane.f32.xlu0 %v413
    %v433 = vpop.xlane.xlu0 %432
    %434 = vadd.xlane.f32.xlu0 %v414
    %v435 = vpop.xlane.xlu0 %434
    %436 = vadd.xlane.f32.xlu0 %v415
    %v437 = vpop.xlane.xlu0 %436
    %438 = vadd.xlane.f32.xlu0 %v416
    %v439 = vpop.xlane.xlu0 %438
    %440 = vadd.xlane.f32.xlu0 %v417
    %v441 = vpop.xlane.xlu0 %440
    %442 = vadd.xlane.f32.xlu0 %v418
    %v443 = vpop.xlane.xlu0 %442
    %444 = vadd.xlane.f32.xlu0 %v419
    %v445 = vpop.xlane.xlu0 %444
    %446 = vadd.xlane.f32.xlu0 %v420
    %v447 = vpop.xlane.xlu0 %446
    %448 = vadd.xlane.f32.xlu0 %v421
    %v449 = vpop.xlane.xlu0 %448
    %450 = vadd.xlane.f32.xlu0 %v422
    %v451 = vpop.xlane.xlu0 %450
    %452 = vadd.xlane.f32.xlu0 %v423
    %v453 = vpop.xlane.xlu0 %452
    %454 = vadd.xlane.f32.xlu0 %v424
    %v455 = vpop.xlane.xlu0 %454
    %456 = vadd.xlane.f32.xlu0 %v425
    %v457 = vpop.xlane.xlu0 %456
    %v458 = vadd.f32 %v427, 1e-30
    %v459 = vadd.f32 %v429, 1e-30
    %v460 = vadd.f32 %v431, 1e-30
    %v461 = vadd.f32 %v433, 1e-30
    %v462 = vadd.f32 %v435, 1e-30
    %v463 = vadd.f32 %v437, 1e-30
    %v464 = vadd.f32 %v439, 1e-30
    %v465 = vadd.f32 %v441, 1e-30
    %v466 = vadd.f32 %v443, 1e-30
    %v467 = vadd.f32 %v445, 1e-30
    %v468 = vadd.f32 %v447, 1e-30
    %v469 = vadd.f32 %v449, 1e-30
    %v470 = vadd.f32 %v451, 1e-30
    %v471 = vadd.f32 %v453, 1e-30
    %v472 = vadd.f32 %v455, 1e-30
    %v473 = vadd.f32 %v457, 1e-30
    %v474 = vlog2.pop %v458
    %v475 = vmul.f32 %v474, 0.6931472
    %v476 = vlog2.pop %v459
    %v477 = vmul.f32 %v476, 0.6931472
    %v478 = vlog2.pop %v460
    %v479 = vmul.f32 %v478, 0.6931472
    %v480 = vlog2.pop %v461
    %v481 = vmul.f32 %v480, 0.6931472
    %v482 = vlog2.pop %v462
    %v483 = vmul.f32 %v482, 0.6931472
    %v484 = vlog2.pop %v463
    %v485 = vmul.f32 %v484, 0.6931472
    %v486 = vlog2.pop %v464
    %v487 = vmul.f32 %v486, 0.6931472
    %v488 = vlog2.pop %v465
    %v489 = vmul.f32 %v488, 0.6931472
    %v490 = vlog2.pop %v466
    %v491 = vmul.f32 %v490, 0.6931472
    %v492 = vlog2.pop %v467
    %v493 = vmul.f32 %v492, 0.6931472
    %v494 = vlog2.pop %v468
    %v495 = vmul.f32 %v494, 0.6931472
    %v496 = vlog2.pop %v469
    %v497 = vmul.f32 %v496, 0.6931472
    %v498 = vlog2.pop %v470
    %v499 = vmul.f32 %v498, 0.6931472
    %v500 = vlog2.pop %v471
    %v501 = vmul.f32 %v500, 0.6931472
    %v502 = vlog2.pop %v472
    %v503 = vmul.f32 %v502, 0.6931472
    %v504 = vlog2.pop %v473
    %v505 = vmul.f32 %v504, 0.6931472
    %v506 = vsel %vm298, 1, 0
    %v507 = vsel %vm299, 1, 0
    %v508 = vsel %vm300, 1, 0
    %v509 = vsel %vm301, 1, 0
    %v510 = vsel %vm302, 1, 0
    %v511 = vsel %vm303, 1, 0
    %v512 = vsel %vm304, 1, 0
    %v513 = vsel %vm305, 1, 0
    %v514 = vsel %vm306, 1, 0
    %v515 = vsel %vm307, 1, 0
    %v516 = vsel %vm308, 1, 0
    %v517 = vsel %vm309, 1, 0
    %v518 = vsel %vm310, 1, 0
    %v519 = vsel %vm311, 1, 0
    %v520 = vsel %vm312, 1, 0
    %v521 = vsel %vm313, 1, 0
    %v522 = vcvt.s32.f32 %v506
    %v523 = vcvt.s32.f32 %v507
    %v524 = vcvt.s32.f32 %v508
    %v525 = vcvt.s32.f32 %v509
    %v526 = vcvt.s32.f32 %v510
    %v527 = vcvt.s32.f32 %v511
    %v528 = vcvt.s32.f32 %v512
    %v529 = vcvt.s32.f32 %v513
    %v530 = vcvt.s32.f32 %v514
    %v531 = vcvt.s32.f32 %v515
    %v532 = vcvt.s32.f32 %v516
    %v533 = vcvt.s32.f32 %v517
    %v534 = vcvt.s32.f32 %v518
    %v535 = vcvt.s32.f32 %v519
    %v536 = vcvt.s32.f32 %v520
    %v537 = vcvt.s32.f32 %v521
    %538 = vadd.xlane.f32.xlu0 %v522
    %v539 = vpop.xlane.xlu0 %538
    %540 = vadd.xlane.f32.xlu0 %v523
    %v541 = vpop.xlane.xlu0 %540
    %542 = vadd.xlane.f32.xlu0 %v524
    %v543 = vpop.xlane.xlu0 %542
    %544 = vadd.xlane.f32.xlu0 %v525
    %v545 = vpop.xlane.xlu0 %544
    %546 = vadd.xlane.f32.xlu0 %v526
    %v547 = vpop.xlane.xlu0 %546
    %548 = vadd.xlane.f32.xlu0 %v527
    %v549 = vpop.xlane.xlu0 %548
    %550 = vadd.xlane.f32.xlu0 %v528
    %v551 = vpop.xlane.xlu0 %550
    %552 = vadd.xlane.f32.xlu0 %v529
    %v553 = vpop.xlane.xlu0 %552
    %554 = vadd.xlane.f32.xlu0 %v530
    %v555 = vpop.xlane.xlu0 %554
    %556 = vadd.xlane.f32.xlu0 %v531
    %v557 = vpop.xlane.xlu0 %556
    %558 = vadd.xlane.f32.xlu0 %v532
    %v559 = vpop.xlane.xlu0 %558
    %560 = vadd.xlane.f32.xlu0 %v533
    %v561 = vpop.xlane.xlu0 %560
    %562 = vadd.xlane.f32.xlu0 %v534
    %v563 = vpop.xlane.xlu0 %562
    %564 = vadd.xlane.f32.xlu0 %v535
    %v565 = vpop.xlane.xlu0 %564
    %566 = vadd.xlane.f32.xlu0 %v536
    %v567 = vpop.xlane.xlu0 %566
    %568 = vadd.xlane.f32.xlu0 %v537
    %v569 = vpop.xlane.xlu0 %568
    %v570 = vsel %vm298, %v362, 0.0
    %v571 = vsel %vm299, %v363, 0.0
    %v572 = vsel %vm300, %v364, 0.0
    %v573 = vsel %vm301, %v365, 0.0
    %v574 = vsel %vm302, %v366, 0.0
    %v575 = vsel %vm303, %v367, 0.0
    %v576 = vsel %vm304, %v368, 0.0
    %v577 = vsel %vm305, %v369, 0.0
    %v578 = vsel %vm306, %v370, 0.0
    %v579 = vsel %vm307, %v371, 0.0
    %v580 = vsel %vm308, %v372, 0.0
    %v581 = vsel %vm309, %v373, 0.0
    %v582 = vsel %vm310, %v374, 0.0
    %v583 = vsel %vm311, %v375, 0.0
    %v584 = vsel %vm312, %v376, 0.0
    %v585 = vsel %vm313, %v377, 0.0
    %586 = vadd.xlane.f32.xlu0 %v570
    %v587 = vpop.xlane.xlu0 %586
    %588 = vadd.xlane.f32.xlu0 %v571
    %v589 = vpop.xlane.xlu0 %588
    %590 = vadd.xlane.f32.xlu0 %v572
    %v591 = vpop.xlane.xlu0 %590
    %592 = vadd.xlane.f32.xlu0 %v573
    %v593 = vpop.xlane.xlu0 %592
    %594 = vadd.xlane.f32.xlu0 %v574
    %v595 = vpop.xlane.xlu0 %594
    %596 = vadd.xlane.f32.xlu0 %v575
    %v597 = vpop.xlane.xlu0 %596
    %598 = vadd.xlane.f32.xlu0 %v576
    %v599 = vpop.xlane.xlu0 %598
    %600 = vadd.xlane.f32.xlu0 %v577
    %v601 = vpop.xlane.xlu0 %600
    %602 = vadd.xlane.f32.xlu0 %v578
    %v603 = vpop.xlane.xlu0 %602
    %604 = vadd.xlane.f32.xlu0 %v579
    %v605 = vpop.xlane.xlu0 %604
    %606 = vadd.xlane.f32.xlu0 %v580
    %v607 = vpop.xlane.xlu0 %606
    %608 = vadd.xlane.f32.xlu0 %v581
    %v609 = vpop.xlane.xlu0 %608
    %610 = vadd.xlane.f32.xlu0 %v582
    %v611 = vpop.xlane.xlu0 %610
    %612 = vadd.xlane.f32.xlu0 %v583
    %v613 = vpop.xlane.xlu0 %612
    %614 = vadd.xlane.f32.xlu0 %v584
    %v615 = vpop.xlane.xlu0 %614
    %616 = vadd.xlane.f32.xlu0 %v585
    %v617 = vpop.xlane.xlu0 %616
    %vm618 = vcmp.lt.s32.totalorder %v165, 8
    %vm619 = vcmp.lt.s32.totalorder %v166, 8
    %vm620 = vcmp.lt.s32.totalorder %v167, 8
    %vm621 = vcmp.lt.s32.totalorder %v168, 8
    %vm622 = vcmp.lt.s32.totalorder %v169, 8
    %vm623 = vcmp.lt.s32.totalorder %v170, 8
    %vm624 = vcmp.lt.s32.totalorder %v171, 8
    %vm625 = vcmp.lt.s32.totalorder %v172, 8
    %vm626 = vcmp.lt.s32.totalorder %v173, 8
    %vm627 = vcmp.lt.s32.totalorder %v174, 8
    %vm628 = vcmp.lt.s32.totalorder %v175, 8
    %vm629 = vcmp.lt.s32.totalorder %v176, 8
    %vm630 = vcmp.lt.s32.totalorder %v177, 8
    %vm631 = vcmp.lt.s32.totalorder %v178, 8
    %vm632 = vcmp.lt.s32.totalorder %v179, 8
    %vm633 = vcmp.lt.s32.totalorder %v180, 8
    %v634 = vsel %vm618, %v539, 1.0
    %v635 = vsel %vm619, %v541, 1.0
    %v636 = vsel %vm620, %v543, 1.0
    %v637 = vsel %vm621, %v545, 1.0
    %v638 = vsel %vm622, %v547, 1.0
    %v639 = vsel %vm623, %v549, 1.0
    %v640 = vsel %vm624, %v551, 1.0
    %v641 = vsel %vm625, %v553, 1.0
    %v642 = vsel %vm626, %v555, 1.0
    %v643 = vsel %vm627, %v557, 1.0
    %v644 = vsel %vm628, %v559, 1.0
    %v645 = vsel %vm629, %v561, 1.0
    %v646 = vsel %vm630, %v563, 1.0
    %v647 = vsel %vm631, %v565, 1.0
    %v648 = vsel %vm632, %v567, 1.0
    %v649 = vsel %vm633, %v569, 1.0
    %v650 = vrcp.pop %v634
    %v651 = vmul.f32 %v634, %v650
    %v652 = vsub.f32 1.0, %v651
    %v653 = vmul.f32 %v650, %v652
    %v654 = vadd.f32 %v650, %v653
    %vm655 = vweird.f32 %v634
    %vm656 = vweird.f32 %v650
    %vm657 = vmor %vm655, %vm656
    %v658 = vsel %vm657, %v650, %v654
    %v659 = vand.u32 2147483647, %v634
    %vm660 = vcmp.eq.f32.partialorder %v659, 8.507059e+37
    %v661 = vand.u32 %v634, 2147483648
    %v662 = vor.u32 1.1754944e-38, %v661
    %v663 = vsel %vm660, %v662, %v658
    %v664 = vmul.f32 %v587, %v663
    %v665 = vrcp.pop %v635
    %v666 = vmul.f32 %v635, %v665
    %v667 = vsub.f32 1.0, %v666
    %v668 = vmul.f32 %v665, %v667
    %v669 = vadd.f32 %v665, %v668
    %vm670 = vweird.f32 %v635
    %vm671 = vweird.f32 %v665
    %vm672 = vmor %vm670, %vm671
    %v673 = vsel %vm672, %v665, %v669
    %v674 = vand.u32 2147483647, %v635
    %vm675 = vcmp.eq.f32.partialorder %v674, 8.507059e+37
    %v676 = vand.u32 %v635, 2147483648
    %v677 = vor.u32 1.1754944e-38, %v676
    %v678 = vsel %vm675, %v677, %v673
    %v679 = vmul.f32 %v589, %v678
    %v680 = vrcp.pop %v636
    %v681 = vmul.f32 %v636, %v680
    %v682 = vsub.f32 1.0, %v681
    %v683 = vmul.f32 %v680, %v682
    %v684 = vadd.f32 %v680, %v683
    %vm685 = vweird.f32 %v636
    %vm686 = vweird.f32 %v680
    %vm687 = vmor %vm685, %vm686
    %v688 = vsel %vm687, %v680, %v684
    %v689 = vand.u32 2147483647, %v636
    %vm690 = vcmp.eq.f32.partialorder %v689, 8.507059e+37
    %v691 = vand.u32 %v636, 2147483648
    %v692 = vor.u32 1.1754944e-38, %v691
    %v693 = vsel %vm690, %v692, %v688
    %v694 = vmul.f32 %v591, %v693
    %v695 = vrcp.pop %v637
    %v696 = vmul.f32 %v637, %v695
    %v697 = vsub.f32 1.0, %v696
    %v698 = vmul.f32 %v695, %v697
    %v699 = vadd.f32 %v695, %v698
    %vm700 = vweird.f32 %v637
    %vm701 = vweird.f32 %v695
    %vm702 = vmor %vm700, %vm701
    %v703 = vsel %vm702, %v695, %v699
    %v704 = vand.u32 2147483647, %v637
    %vm705 = vcmp.eq.f32.partialorder %v704, 8.507059e+37
    %v706 = vand.u32 %v637, 2147483648
    %v707 = vor.u32 1.1754944e-38, %v706
    %v708 = vsel %vm705, %v707, %v703
    %v709 = vmul.f32 %v593, %v708
    %v710 = vrcp.pop %v638
    %v711 = vmul.f32 %v638, %v710
    %v712 = vsub.f32 1.0, %v711
    %v713 = vmul.f32 %v710, %v712
    %v714 = vadd.f32 %v710, %v713
    %vm715 = vweird.f32 %v638
    %vm716 = vweird.f32 %v710
    %vm717 = vmor %vm715, %vm716
    %v718 = vsel %vm717, %v710, %v714
    %v719 = vand.u32 2147483647, %v638
    %vm720 = vcmp.eq.f32.partialorder %v719, 8.507059e+37
    %v721 = vand.u32 %v638, 2147483648
    %v722 = vor.u32 1.1754944e-38, %v721
    %v723 = vsel %vm720, %v722, %v718
    %v724 = vmul.f32 %v595, %v723
    %v725 = vrcp.pop %v639
    %v726 = vmul.f32 %v639, %v725
    %v727 = vsub.f32 1.0, %v726
    %v728 = vmul.f32 %v725, %v727
    %v729 = vadd.f32 %v725, %v728
    %vm730 = vweird.f32 %v639
    %vm731 = vweird.f32 %v725
    %vm732 = vmor %vm730, %vm731
    %v733 = vsel %vm732, %v725, %v729
    %v734 = vand.u32 2147483647, %v639
    %vm735 = vcmp.eq.f32.partialorder %v734, 8.507059e+37
    %v736 = vand.u32 %v639, 2147483648
    %v737 = vor.u32 1.1754944e-38, %v736
    %v738 = vsel %vm735, %v737, %v733
    %v739 = vmul.f32 %v597, %v738
    %v740 = vrcp.pop %v640
    %v741 = vmul.f32 %v640, %v740
    %v742 = vsub.f32 1.0, %v741
    %v743 = vmul.f32 %v740, %v742
    %v744 = vadd.f32 %v740, %v743
    %vm745 = vweird.f32 %v640
    %vm746 = vweird.f32 %v740
    %vm747 = vmor %vm745, %vm746
    %v748 = vsel %vm747, %v740, %v744
    %v749 = vand.u32 2147483647, %v640
    %vm750 = vcmp.eq.f32.partialorder %v749, 8.507059e+37
    %v751 = vand.u32 %v640, 2147483648
    %v752 = vor.u32 1.1754944e-38, %v751
    %v753 = vsel %vm750, %v752, %v748
    %v754 = vmul.f32 %v599, %v753
    %v755 = vrcp.pop %v641
    %v756 = vmul.f32 %v641, %v755
    %v757 = vsub.f32 1.0, %v756
    %v758 = vmul.f32 %v755, %v757
    %v759 = vadd.f32 %v755, %v758
    %vm760 = vweird.f32 %v641
    %vm761 = vweird.f32 %v755
    %vm762 = vmor %vm760, %vm761
    %v763 = vsel %vm762, %v755, %v759
    %v764 = vand.u32 2147483647, %v641
    %vm765 = vcmp.eq.f32.partialorder %v764, 8.507059e+37
    %v766 = vand.u32 %v641, 2147483648
    %v767 = vor.u32 1.1754944e-38, %v766
    %v768 = vsel %vm765, %v767, %v763
    %v769 = vmul.f32 %v601, %v768
    %v770 = vrcp.pop %v642
    %v771 = vmul.f32 %v642, %v770
    %v772 = vsub.f32 1.0, %v771
    %v773 = vmul.f32 %v770, %v772
    %v774 = vadd.f32 %v770, %v773
    %vm775 = vweird.f32 %v642
    %vm776 = vweird.f32 %v770
    %vm777 = vmor %vm775, %vm776
    %v778 = vsel %vm777, %v770, %v774
    %v779 = vand.u32 2147483647, %v642
    %vm780 = vcmp.eq.f32.partialorder %v779, 8.507059e+37
    %v781 = vand.u32 %v642, 2147483648
    %v782 = vor.u32 1.1754944e-38, %v781
    %v783 = vsel %vm780, %v782, %v778
    %v784 = vmul.f32 %v603, %v783
    %v785 = vrcp.pop %v643
    %v786 = vmul.f32 %v643, %v785
    %v787 = vsub.f32 1.0, %v786
    %v788 = vmul.f32 %v785, %v787
    %v789 = vadd.f32 %v785, %v788
    %vm790 = vweird.f32 %v643
    %vm791 = vweird.f32 %v785
    %vm792 = vmor %vm790, %vm791
    %v793 = vsel %vm792, %v785, %v789
    %v794 = vand.u32 2147483647, %v643
    %vm795 = vcmp.eq.f32.partialorder %v794, 8.507059e+37
    %v796 = vand.u32 %v643, 2147483648
    %v797 = vor.u32 1.1754944e-38, %v796
    %v798 = vsel %vm795, %v797, %v793
    %v799 = vmul.f32 %v605, %v798
    %v800 = vrcp.pop %v644
    %v801 = vmul.f32 %v644, %v800
    %v802 = vsub.f32 1.0, %v801
    %v803 = vmul.f32 %v800, %v802
    %v804 = vadd.f32 %v800, %v803
    %vm805 = vweird.f32 %v644
    %vm806 = vweird.f32 %v800
    %vm807 = vmor %vm805, %vm806
    %v808 = vsel %vm807, %v800, %v804
    %v809 = vand.u32 2147483647, %v644
    %vm810 = vcmp.eq.f32.partialorder %v809, 8.507059e+37
    %v811 = vand.u32 %v644, 2147483648
    %v812 = vor.u32 1.1754944e-38, %v811
    %v813 = vsel %vm810, %v812, %v808
    %v814 = vmul.f32 %v607, %v813
    %v815 = vrcp.pop %v645
    %v816 = vmul.f32 %v645, %v815
    %v817 = vsub.f32 1.0, %v816
    %v818 = vmul.f32 %v815, %v817
    %v819 = vadd.f32 %v815, %v818
    %vm820 = vweird.f32 %v645
    %vm821 = vweird.f32 %v815
    %vm822 = vmor %vm820, %vm821
    %v823 = vsel %vm822, %v815, %v819
    %v824 = vand.u32 2147483647, %v645
    %vm825 = vcmp.eq.f32.partialorder %v824, 8.507059e+37
    %v826 = vand.u32 %v645, 2147483648
    %v827 = vor.u32 1.1754944e-38, %v826
    %v828 = vsel %vm825, %v827, %v823
    %v829 = vmul.f32 %v609, %v828
    %v830 = vrcp.pop %v646
    %v831 = vmul.f32 %v646, %v830
    %v832 = vsub.f32 1.0, %v831
    %v833 = vmul.f32 %v830, %v832
    %v834 = vadd.f32 %v830, %v833
    %vm835 = vweird.f32 %v646
    %vm836 = vweird.f32 %v830
    %vm837 = vmor %vm835, %vm836
    %v838 = vsel %vm837, %v830, %v834
    %v839 = vand.u32 2147483647, %v646
    %vm840 = vcmp.eq.f32.partialorder %v839, 8.507059e+37
    %v841 = vand.u32 %v646, 2147483648
    %v842 = vor.u32 1.1754944e-38, %v841
    %v843 = vsel %vm840, %v842, %v838
    %v844 = vmul.f32 %v611, %v843
    %v845 = vrcp.pop %v647
    %v846 = vmul.f32 %v647, %v845
    %v847 = vsub.f32 1.0, %v846
    %v848 = vmul.f32 %v845, %v847
    %v849 = vadd.f32 %v845, %v848
    %vm850 = vweird.f32 %v647
    %vm851 = vweird.f32 %v845
    %vm852 = vmor %vm850, %vm851
    %v853 = vsel %vm852, %v845, %v849
    %v854 = vand.u32 2147483647, %v647
    %vm855 = vcmp.eq.f32.partialorder %v854, 8.507059e+37
    %v856 = vand.u32 %v647, 2147483648
    %v857 = vor.u32 1.1754944e-38, %v856
    %v858 = vsel %vm855, %v857, %v853
    %v859 = vmul.f32 %v613, %v858
    %v860 = vrcp.pop %v648
    %v861 = vmul.f32 %v648, %v860
    %v862 = vsub.f32 1.0, %v861
    %v863 = vmul.f32 %v860, %v862
    %v864 = vadd.f32 %v860, %v863
    %vm865 = vweird.f32 %v648
    %vm866 = vweird.f32 %v860
    %vm867 = vmor %vm865, %vm866
    %v868 = vsel %vm867, %v860, %v864
    %v869 = vand.u32 2147483647, %v648
    %vm870 = vcmp.eq.f32.partialorder %v869, 8.507059e+37
    %v871 = vand.u32 %v648, 2147483648
    %v872 = vor.u32 1.1754944e-38, %v871
    %v873 = vsel %vm870, %v872, %v868
    %v874 = vmul.f32 %v615, %v873
    %v875 = vrcp.pop %v649
    %v876 = vmul.f32 %v649, %v875
    %v877 = vsub.f32 1.0, %v876
    %v878 = vmul.f32 %v875, %v877
    %v879 = vadd.f32 %v875, %v878
    %vm880 = vweird.f32 %v649
    %vm881 = vweird.f32 %v875
    %vm882 = vmor %vm880, %vm881
    %v883 = vsel %vm882, %v875, %v879
    %v884 = vand.u32 2147483647, %v649
    %vm885 = vcmp.eq.f32.partialorder %v884, 8.507059e+37
    %v886 = vand.u32 %v649, 2147483648
    %v887 = vor.u32 1.1754944e-38, %v886
    %v888 = vsel %vm885, %v887, %v883
    %v889 = vmul.f32 %v617, %v888
    %v890 = vsub.f32 %v664, %v475
    %v891 = vsub.f32 %v679, %v477
    %v892 = vsub.f32 %v694, %v479
    %v893 = vsub.f32 %v709, %v481
    %v894 = vsub.f32 %v724, %v483
    %v895 = vsub.f32 %v739, %v485
    %v896 = vsub.f32 %v754, %v487
    %v897 = vsub.f32 %v769, %v489
    %v898 = vsub.f32 %v784, %v491
    %v899 = vsub.f32 %v799, %v493
    %v900 = vsub.f32 %v814, %v495
    %v901 = vsub.f32 %v829, %v497
    %v902 = vsub.f32 %v844, %v499
    %v903 = vsub.f32 %v859, %v501
    %v904 = vsub.f32 %v874, %v503
    %v905 = vsub.f32 %v889, %v505
    %v906 = vmul.f32 %v890, -1.0
    %v907 = vmul.f32 %v891, -1.0
    %v908 = vmul.f32 %v892, -1.0
    %v909 = vmul.f32 %v893, -1.0
    %v910 = vmul.f32 %v894, -1.0
    %v911 = vmul.f32 %v895, -1.0
    %v912 = vmul.f32 %v896, -1.0
    %v913 = vmul.f32 %v897, -1.0
    %v914 = vmul.f32 %v898, -1.0
    %v915 = vmul.f32 %v899, -1.0
    %v916 = vmul.f32 %v900, -1.0
    %v917 = vmul.f32 %v901, -1.0
    %v918 = vmul.f32 %v902, -1.0
    %v919 = vmul.f32 %v903, -1.0
    %v920 = vmul.f32 %v904, -1.0
    %v921 = vmul.f32 %v905, -1.0
    %v922 = vsel %vm618, %v906, 0.0
    %v923 = vsel %vm619, %v907, 0.0
    %v924 = vsel %vm620, %v908, 0.0
    %v925 = vsel %vm621, %v909, 0.0
    %v926 = vsel %vm622, %v910, 0.0
    %v927 = vsel %vm623, %v911, 0.0
    %v928 = vsel %vm624, %v912, 0.0
    %v929 = vsel %vm625, %v913, 0.0
    %v930 = vsel %vm626, %v914, 0.0
    %v931 = vsel %vm627, %v915, 0.0
    %v932 = vsel %vm628, %v916, 0.0
    %v933 = vsel %vm629, %v917, 0.0
    %v934 = vsel %vm630, %v918, 0.0
    %v935 = vsel %vm631, %v919, 0.0
    %v936 = vsel %vm632, %v920, 0.0
    %v937 = vsel %vm633, %v921, 0.0
    %vm938 = vcmask 7168
    %939 = vst.msk [vmem:[%s4] sm:$0xff] %vm938, %v922
    %940 = vst.msk [vmem:[%s4 + $0x8] sm:$0xff] %vm938, %v923
    %941 = vst.msk [vmem:[%s4 + $0x10] sm:$0xff] %vm938, %v924
    %942 = vst.msk [vmem:[%s4 + $0x18] sm:$0xff] %vm938, %v925
    %943 = vst.msk [vmem:[%s4 + $0x20] sm:$0xff] %vm938, %v926
    %944 = vst.msk [vmem:[%s4 + $0x28] sm:$0xff] %vm938, %v927
    %945 = vst.msk [vmem:[%s4 + $0x30] sm:$0xff] %vm938, %v928
    %946 = vst.msk [vmem:[%s4 + $0x38] sm:$0xff] %vm938, %v929
    %947 = vst.msk [vmem:[%s4 + $0x40] sm:$0xff] %vm938, %v930
    %948 = vst.msk [vmem:[%s4 + $0x48] sm:$0xff] %vm938, %v931
    %949 = vst.msk [vmem:[%s4 + $0x50] sm:$0xff] %vm938, %v932
    %950 = vst.msk [vmem:[%s4 + $0x58] sm:$0xff] %vm938, %v933
    %951 = vst.msk [vmem:[%s4 + $0x60] sm:$0xff] %vm938, %v934
    %952 = vst.msk [vmem:[%s4 + $0x68] sm:$0xff] %vm938, %v935
    %953 = vst.msk [vmem:[%s4 + $0x70] sm:$0xff] %vm938, %v936
    %954 = vst.msk [vmem:[%s4 + $0x78] sm:$0xff] %vm938, %v937
    // Predicated region
    $region22: #{tpu_custom_call.1} parent=1 // pred_check
      _
    $region23: #{tpu_custom_call.1} parent=1 // pred_check_branch
      %956 = sbr.rel (0) target = $region25
    $region24: #{tpu_custom_call.1} parent=1 // pred_region
      _
    $region25: #{tpu_custom_call.1} parent=1 // pred_fallthru
      _
    // Predicated region
    $region26: #{tpu_custom_call.1} parent=1 // pred_check
      _
    $region27: #{tpu_custom_call.1} parent=1 // pred_check_branch
      %958 = sbr.rel (0) target = $region29
    $region28: #{tpu_custom_call.1} parent=1 // pred_region
      _
    $region29: #{tpu_custom_call.1} parent=1 // pred_fallthru
      _
    %959 = vsyncpa [#allocation3], 1

</llo_original>
